<compile_context>
chip_gen: v5e
topology: v5e:2x2
jax: 0.10.0
libtpu: 0.0.40
codegen_flags: <defaults>
</compile_context>

<pallas_src>
import functools

import numpy as np
import jax
import jax.numpy as jnp
from jax.experimental import pallas as pl
from jax.experimental.pallas import tpu as pltpu


_BACKBONE_STRIDE = 4


def _round_up(x, m):
    return ((x + m - 1) // m) * m


@functools.lru_cache(maxsize=None)
def _vmem_limit_bytes():
    """Per-generation VMEM budget (half of physical, capped), safe fallback."""
    try:
        info = pltpu.get_tpu_info()
        cap = getattr(info, "vmem_capacity_bytes", None)
        if cap:
            return int(min(cap // 2, 96 * 1024 * 1024))
    except Exception:
        pass
    return 32 * 1024 * 1024


# ----------------------------------------------------------------------------
# Pallas kernels
# ----------------------------------------------------------------------------
def _fused_conv_kernel(x0_ref, x1_ref, w1_ref, w2_ref, o_ref):
    """Fused (backbone1+classifier-half) + (backbone2+classifier-half).

    Layout is channels-on-sublanes / pixels-on-lanes:
      x0, x1 : (1, C_in, TP)   pixel tile of each strided input image
      w1, w2 : (n_cls, C_in)   pre-composed (classifier_half @ backbone) weights
      o      : (1, n_cls, TP)
    """
    y = (jnp.dot(w1_ref[...], x0_ref[0], preferred_element_type=jnp.float32)
         + jnp.dot(w2_ref[...], x1_ref[0], preferred_element_type=jnp.float32))
    o_ref[0] = y.astype(o_ref.dtype)


def _bilinear_kernel(y_ref, wwT_ref, wh_ref, o_ref, t_ref):
    """Fused W-interp + H-interp for one (n, c) image, one H-row tile.

      y   : (1, 1, Hs, Ws)   low-res logits for this (n, c)
      wwT : (Ws, W_out)      column-interp matrix (transposed)
      wh  : (TH, Hs)         row-interp matrix tile
      o   : (1, 1, TH, W_out)
      t   : VMEM scratch (Hs, W_out), computed once per (n, c)
    """
    @pl.when(pl.program_id(2) == 0)
    def _():
        t_ref[...] = jnp.dot(y_ref[0, 0], wwT_ref[...],
                             preferred_element_type=jnp.float32)
    o_ref[0, 0] = jnp.dot(wh_ref[...], t_ref[...],
                          preferred_element_type=jnp.float32).astype(o_ref.dtype)


# ----------------------------------------------------------------------------
# Interp matrices (precomputed with numpy, cached -> hoisted out of jit)
# ----------------------------------------------------------------------------
@functools.lru_cache(maxsize=None)
def _interp_matrix(in_size, out_size):
    """Row-interp matrix matching torch bilinear, align_corners=False."""
    scale = in_size / out_size
    i = np.arange(out_size, dtype=np.float64)
    src = (i + 0.5) * scale - 0.5
    src = np.maximum(src, 0.0)                      # torch clamps negative src
    idx0 = np.minimum(np.floor(src).astype(np.int64), in_size - 1)
    idx1 = np.minimum(idx0 + 1, in_size - 1)
    lam1 = src - idx0
    lam0 = 1.0 - lam1
    m = np.zeros((out_size, in_size), dtype=np.float64)
    rows = np.arange(out_size)
    np.add.at(m, (rows, idx0), lam0)
    np.add.at(m, (rows, idx1), lam1)
    return m.astype(np.float32)


# ----------------------------------------------------------------------------
# Tile selection helpers
# ----------------------------------------------------------------------------
def _pick_conv_pixel_tile(P, c_in, n_cls, budget_bytes=6 * 1024 * 1024):
    """Pixel-tile for the conv stage; full per-image tile if it fits VMEM."""
    per_pix = (2 * c_in + n_cls) * 4 * 2            # inputs+output, double-buffered
    if P * per_pix <= budget_bytes:
        return P                                    # full dim -> no (8,128) rule
    return max(128, (budget_bytes // per_pix) // 128 * 128)


def _pick_h_tile(H_out, W_out, budget_bytes=4 * 1024 * 1024):
    """Output-row tile for the bilinear stage (multiple of 8 or full H_out)."""
    max_rows = max(8, (budget_bytes // max(4 * W_out, 1)) // 8 * 8)
    return H_out if max_rows >= H_out else max_rows


# ----------------------------------------------------------------------------
# Forward pass (faithful to _SimpleSegmentationModel.forward)
# ----------------------------------------------------------------------------
# TODO(synk): backbone1/backbone2/classifier are external injected nn.Modules in
# the original; they are linear stand-ins here, which is what allows pre-composing
# (classifier @ backbone) into a single per-input weight.  Drop the pre-composition
# if real nonlinear modules are substituted.
def simple_segmentation_forward(params, x0, x1, gini=None, use_bf16=False):
    N, C_in, H, W = x0.shape
    input_shape = (H, W)
    vmem = _vmem_limit_bytes()

    # --- stride-4 backbone inputs -> (N, C_in, P) with a free reshape
    x0s = x0[:, :, ::_BACKBONE_STRIDE, ::_BACKBONE_STRIDE]
    x1s = x1[:, :, ::_BACKBONE_STRIDE, ::_BACKBONE_STRIDE]
    Hs, Ws = x0s.shape[-2:]
    P = Hs * Ws
    x0r = x0s.reshape(N, C_in, P)
    x1r = x1s.reshape(N, C_in, P)

    # --- pre-compose classifier @ backbone (tiny matrices, done in fp32)
    w1 = params["backbone1_w"]                       # (C_feat, C_in)
    w2 = params["backbone2_w"]
    wc = params["classifier_w"]                      # (n_cls, 2*C_feat)
    c_feat = w1.shape[0]
    n_cls = wc.shape[0]
    w1p = jnp.dot(wc[:, :c_feat], w1)                # (n_cls, C_in)
    w2p = jnp.dot(wc[:, c_feat:], w2)

    compute_dtype = jnp.bfloat16 if use_bf16 else x0.dtype
    x0r = x0r.astype(compute_dtype)
    x1r = x1r.astype(compute_dtype)
    w1p = w1p.astype(compute_dtype)
    w2p = w2p.astype(compute_dtype)

    # --- fused conv stage, gridded over (image, pixel tiles) — both parallel
    tp = _pick_conv_pixel_tile(P, C_in, n_cls)
    n_pt = pl.cdiv(P, tp)

    logits = pl.pallas_call(
        _fused_conv_kernel,
        out_shape=jax.ShapeDtypeStruct((N, n_cls, P), jnp.float32),
        grid=(N, n_pt),
        in_specs=[
            pl.BlockSpec((1, C_in, tp), lambda n, i: (n, 0, i)),
            pl.BlockSpec((1, C_in, tp), lambda n, i: (n, 0, i)),
            pl.BlockSpec((n_cls, C_in), lambda n, i: (0, 0)),
            pl.BlockSpec((n_cls, C_in), lambda n, i: (0, 0)),
        ],
        out_specs=pl.BlockSpec((1, n_cls, tp), lambda n, i: (n, 0, i)),
        compiler_params=pltpu.CompilerParams(
            dimension_semantics=("parallel", "parallel"),
            vmem_limit_bytes=vmem),
    )(x0r, x1r, w1p, w2p)

    logits = logits.reshape(N, n_cls, Hs, Ws)        # free reshape (contiguous)

    # --- fused bilinear upsample writing directly into (N, n_cls, H, W)
    H_out, W_out = input_shape
    wwT = jnp.asarray(_interp_matrix(Ws, W_out).T)   # (Ws, W_out)
    wh = jnp.asarray(_interp_matrix(Hs, H_out))      # (H_out, Hs)

    th = _pick_h_tile(H_out, W_out)
    n_h = pl.cdiv(H_out, th)
    if th * n_h != H_out:                            # keep wh input reads in-bounds
        wh = jnp.pad(wh, ((0, th * n_h - H_out), (0, 0)))

    out = pl.pallas_call(
        _bilinear_kernel,
        out_shape=jax.ShapeDtypeStruct((N, n_cls, H_out, W_out), jnp.float32),
        grid=(N, n_cls, n_h),
        in_specs=[
            pl.BlockSpec((1, 1, Hs, Ws), lambda n, c, h: (n, c, 0, 0)),
            pl.BlockSpec((Ws, W_out), lambda n, c, h: (0, 0)),
            pl.BlockSpec((th, Hs), lambda n, c, h: (h, 0)),
        ],
        out_specs=pl.BlockSpec((1, 1, th, W_out), lambda n, c, h: (n, c, h, 0)),
        scratch_shapes=[pltpu.VMEM((Hs, W_out), jnp.float32)],
        compiler_params=pltpu.CompilerParams(
            dimension_semantics=("parallel", "parallel", "arbitrary"),
            vmem_limit_bytes=vmem),
    )(logits, wwT, wh)

    return out                                       # (N, n_cls, H, W)


# ----------------------------------------------------------------------------
# Pure-JAX reference (correctness check)
# ----------------------------------------------------------------------------
def _reference_forward(params, x0, x1):
    def conv(x, w, stride=1):
        if stride != 1:
            x = x[:, :, ::stride, ::stride]
        return jnp.einsum("nchw,oc->nohw", x, w)

    f1 = conv(x0, params["backbone1_w"], _BACKBONE_STRIDE)
    f2 = conv(x1, params["backbone2_w"], _BACKBONE_STRIDE)
    y = conv(jnp.concatenate([f1, f2], axis=1), params["classifier_w"])
    H_out, W_out = x0.shape[-2:]
    wh = jnp.asarray(_interp_matrix(y.shape[2], H_out))
    ww = jnp.asarray(_interp_matrix(y.shape[3], W_out))
    return jnp.einsum("oh,nchw,pw->ncop", wh, y, ww)


# ----------------------------------------------------------------------------
if __name__ == "__main__":
    key = jax.random.PRNGKey(0)
    k_x0, k_x1, k_b1, k_b2, k_cls = jax.random.split(key, 5)

    N, C_IN, H, W = 2, 4, 16, 16     # input images (NCHW), small synthetic shapes
    C_FEAT = 8                       # channels produced by each backbone stand-in
    N_CLASSES = 6                    # classifier output channels

    x0 = jax.random.normal(k_x0, (N, C_IN, H, W), dtype=jnp.float32)
    x1 = jax.random.normal(k_x1, (N, C_IN, H, W), dtype=jnp.float32)

    params = {
        "backbone1_w": 0.1 * jax.random.normal(k_b1, (C_FEAT, C_IN), jnp.float32),
        "backbone2_w": 0.1 * jax.random.normal(k_b2, (C_FEAT, C_IN), jnp.float32),
        "classifier_w": 0.1 * jax.random.normal(k_cls, (N_CLASSES, 2 * C_FEAT),
                                                jnp.float32),
    }

    ref = _reference_forward(params, x0, x1)

    # fp32 path (tight check)
    fwd_f32 = jax.jit(simple_segmentation_forward)
    out = jax.block_until_ready(fwd_f32(params, x0, x1))
    assert out.shape == (N, N_CLASSES, H, W), out.shape
    assert jnp.allclose(out, ref, atol=1e-4, rtol=1e-4), float(jnp.abs(out - ref).max())

    # bf16 conv path (fp32 accumulation, bilinear stays fp32; loose check)
    fwd_bf16 = jax.jit(functools.partial(simple_segmentation_forward, use_bf16=True))
    out_bf16 = jax.block_until_ready(fwd_bf16(params, x0, x1))
    assert out_bf16.shape == (N, N_CLASSES, H, W), out_bf16.shape
    assert jnp.allclose(out_bf16, ref, atol=3e-2, rtol=3e-2), \
        float(jnp.abs(out_bf16 - ref).max())

    print("KERNEL_OK")
</pallas_src>

<mosaic_0001>
module attributes {stable_mosaic.version = 11 : i64} {
  func.func @_fused_conv_kernel(%arg0: i32, %arg1: i32, %arg2: memref<1x4x16xf32, #tpu.memory_space<vmem>>, %arg3: memref<1x4x16xf32, #tpu.memory_space<vmem>>, %arg4: memref<6x4xf32, #tpu.memory_space<vmem>>, %arg5: memref<6x4xf32, #tpu.memory_space<vmem>>, %arg6: memref<1x6x16xf32, #tpu.memory_space<vmem>>) attributes {dimension_semantics = [#tpu.dimension_semantics<parallel>, #tpu.dimension_semantics<parallel>], iteration_bounds = array<i64: 2, 1>, scalar_prefetch = 0 : i64, scratch_operands = 0 : i64, tpu.core_type = #tpu.core_type<tc>, window_params = [{transform_indices = @transform_0, window_bounds = array<i64: 1, 4, 16>}, {transform_indices = @transform_1, window_bounds = array<i64: 1, 4, 16>}, {pipeline_mode = #tpu.pipeline_mode<synchronous>, transform_indices = @transform_2, window_bounds = array<i64: 6, 4>}, {pipeline_mode = #tpu.pipeline_mode<synchronous>, transform_indices = @transform_3, window_bounds = array<i64: 6, 4>}, {transform_indices = @transform_4, window_bounds = array<i64: 1, 6, 16>}]} {
    %c0 = arith.constant 0 : index
    %c0_0 = arith.constant 0 : index
    %0 = vector.load %arg4[%c0, %c0_0] : memref<6x4xf32, #tpu.memory_space<vmem>>, vector<6x4xf32>
    %c0_1 = arith.constant 0 : index
    %c0_2 = arith.constant 0 : index
    %c0_3 = arith.constant 0 : index
    %1 = vector.load %arg2[%c0_1, %c0_2, %c0_3] : memref<1x4x16xf32, #tpu.memory_space<vmem>>, vector<1x4x16xf32>
    %2 = vector.shape_cast %1 : vector<1x4x16xf32> to vector<4x16xf32>
    %cst = arith.constant dense<0.000000e+00> : vector<6x16xf32>
    %3 = tpu.matmul %0, %2, %cst {dimension_numbers = #tpu.dot_dimension_numbers<[1], [0], [0], [1], [0, 0, 1, 1], [], []>} : vector<6x4xf32>, vector<4x16xf32>, vector<6x16xf32> -> vector<6x16xf32>
    %c0_4 = arith.constant 0 : index
    %c0_5 = arith.constant 0 : index
    %4 = vector.load %arg5[%c0_4, %c0_5] : memref<6x4xf32, #tpu.memory_space<vmem>>, vector<6x4xf32>
    %c0_6 = arith.constant 0 : index
    %c0_7 = arith.constant 0 : index
    %c0_8 = arith.constant 0 : index
    %5 = vector.load %arg3[%c0_6, %c0_7, %c0_8] : memref<1x4x16xf32, #tpu.memory_space<vmem>>, vector<1x4x16xf32>
    %6 = vector.shape_cast %5 : vector<1x4x16xf32> to vector<4x16xf32>
    %cst_9 = arith.constant dense<0.000000e+00> : vector<6x16xf32>
    %7 = tpu.matmul %4, %6, %cst_9 {dimension_numbers = #tpu.dot_dimension_numbers<[1], [0], [0], [1], [0, 0, 1, 1], [], []>} : vector<6x4xf32>, vector<4x16xf32>, vector<6x16xf32> -> vector<6x16xf32>
    %8 = arith.addf %3, %7 : vector<6x16xf32>
    %c0_10 = arith.constant 0 : index
    %c0_11 = arith.constant 0 : index
    %c0_12 = arith.constant 0 : index
    %9 = vector.load %arg6[%c0_10, %c0_11, %c0_12] : memref<1x6x16xf32, #tpu.memory_space<vmem>>, vector<1x6x16xf32>
    %10 = vector.shape_cast %9 : vector<1x6x16xf32> to vector<6x16xf32>
    %11 = vector.shape_cast %8 : vector<6x16xf32> to vector<1x6x16xf32>
    tpu.vector_store %arg6[%c0_10, %c0_11, %c0_12], %11 {strides = array<i32>} : memref<1x6x16xf32, #tpu.memory_space<vmem>>, vector<1x6x16xf32>,
    return
  }
  func.func @transform_0(%arg0: i32, %arg1: i32) -> (i32, i32, i32) {
    %c0_i32 = arith.constant 0 : i32
    %c0_i32_0 = arith.constant 0 : i32
    return %arg0, %c0_i32, %arg1 : i32, i32, i32
  }
  func.func @transform_1(%arg0: i32, %arg1: i32) -> (i32, i32, i32) {
    %c0_i32 = arith.constant 0 : i32
    %c0_i32_0 = arith.constant 0 : i32
    return %arg0, %c0_i32, %arg1 : i32, i32, i32
  }
  func.func @transform_2(%arg0: i32, %arg1: i32) -> (i32, i32) {
    %c0_i32 = arith.constant 0 : i32
    %c0_i32_0 = arith.constant 0 : i32
    %c0_i32_1 = arith.constant 0 : i32
    return %c0_i32, %c0_i32_0 : i32, i32
  }
  func.func @transform_3(%arg0: i32, %arg1: i32) -> (i32, i32) {
    %c0_i32 = arith.constant 0 : i32
    %c0_i32_0 = arith.constant 0 : i32
    %c0_i32_1 = arith.constant 0 : i32
    return %c0_i32, %c0_i32_0 : i32, i32
  }
  func.func @transform_4(%arg0: i32, %arg1: i32) -> (i32, i32, i32) {
    %c0_i32 = arith.constant 0 : i32
    %c0_i32_0 = arith.constant 0 : i32
    return %arg0, %c0_i32, %arg1 : i32, i32, i32
  }
}

module attributes {stable_mosaic.version = 11 : i64} {
  func.func @_bilinear_kernel(%arg0: i32, %arg1: i32, %arg2: i32, %arg3: memref<1x1x4x4xf32, #tpu.memory_space<vmem>>, %arg4: memref<4x16xf32, #tpu.memory_space<vmem>>, %arg5: memref<16x4xf32, #tpu.memory_space<vmem>>, %arg6: memref<1x1x16x16xf32, #tpu.memory_space<vmem>>, %arg7: memref<4x16xf32, #tpu.memory_space<vmem>>) attributes {dimension_semantics = [#tpu.dimension_semantics<parallel>, #tpu.dimension_semantics<parallel>, #tpu.dimension_semantics<arbitrary>], iteration_bounds = array<i64: 2, 6, 1>, scalar_prefetch = 0 : i64, scratch_operands = 1 : i64, tpu.core_type = #tpu.core_type<tc>, window_params = [{transform_indices = @transform_0, window_bounds = array<i64: 1, 1, 4, 4>}, {pipeline_mode = #tpu.pipeline_mode<synchronous>, transform_indices = @transform_1, window_bounds = array<i64: 4, 16>}, {transform_indices = @transform_2, window_bounds = array<i64: 16, 4>}, {transform_indices = @transform_3, window_bounds = array<i64: 1, 1, 16, 16>}]} {
    %c0_i32 = arith.constant 0 : i32
    %0 = arith.cmpi eq, %arg2, %c0_i32 : i32
    %1 = arith.extui %0 : i1 to i32
    %c0_i32_0 = arith.constant 0 : i32
    %2 = arith.cmpi ne, %1, %c0_i32_0 : i32
    scf.if %2 {
      %c0_8 = arith.constant 0 : index
      %c0_9 = arith.constant 0 : index
      %c0_10 = arith.constant 0 : index
      %c0_11 = arith.constant 0 : index
      %9 = vector.load %arg3[%c0_8, %c0_9, %c0_10, %c0_11] : memref<1x1x4x4xf32, #tpu.memory_space<vmem>>, vector<1x1x4x4xf32>
      %10 = vector.shape_cast %9 : vector<1x1x4x4xf32> to vector<4x4xf32>
      %c0_12 = arith.constant 0 : index
      %c0_13 = arith.constant 0 : index
      %11 = vector.load %arg4[%c0_12, %c0_13] : memref<4x16xf32, #tpu.memory_space<vmem>>, vector<4x16xf32>
      %cst_14 = arith.constant dense<0.000000e+00> : vector<4x16xf32>
      %12 = tpu.matmul %10, %11, %cst_14 {dimension_numbers = #tpu.dot_dimension_numbers<[1], [0], [0], [1], [0, 0, 1, 1], [], []>} : vector<4x4xf32>, vector<4x16xf32>, vector<4x16xf32> -> vector<4x16xf32>
      %c0_15 = arith.constant 0 : index
      %c0_16 = arith.constant 0 : index
      %13 = vector.load %arg7[%c0_15, %c0_16] : memref<4x16xf32, #tpu.memory_space<vmem>>, vector<4x16xf32>
      tpu.vector_store %arg7[%c0_15, %c0_16], %12 {strides = array<i32>} : memref<4x16xf32, #tpu.memory_space<vmem>>, vector<4x16xf32>,
    } else {
    }
    %c0 = arith.constant 0 : index
    %c0_1 = arith.constant 0 : index
    %3 = vector.load %arg5[%c0, %c0_1] : memref<16x4xf32, #tpu.memory_space<vmem>>, vector<16x4xf32>
    %c0_2 = arith.constant 0 : index
    %c0_3 = arith.constant 0 : index
    %4 = vector.load %arg7[%c0_2, %c0_3] : memref<4x16xf32, #tpu.memory_space<vmem>>, vector<4x16xf32>
    %cst = arith.constant dense<0.000000e+00> : vector<16x16xf32>
    %5 = tpu.matmul %3, %4, %cst {dimension_numbers = #tpu.dot_dimension_numbers<[1], [0], [0], [1], [0, 0, 1, 1], [], []>} : vector<16x4xf32>, vector<4x16xf32>, vector<16x16xf32> -> vector<16x16xf32>
    %c0_4 = arith.constant 0 : index
    %c0_5 = arith.constant 0 : index
    %c0_6 = arith.constant 0 : index
    %c0_7 = arith.constant 0 : index
    %6 = vector.load %arg6[%c0_4, %c0_5, %c0_6, %c0_7] : memref<1x1x16x16xf32, #tpu.memory_space<vmem>>, vector<1x1x16x16xf32>
    %7 = vector.shape_cast %6 : vector<1x1x16x16xf32> to vector<16x16xf32>
    %8 = vector.shape_cast %5 : vector<16x16xf32> to vector<1x1x16x16xf32>
    tpu.vector_store %arg6[%c0_4, %c0_5, %c0_6, %c0_7], %8 {strides = array<i32>} : memref<1x1x16x16xf32, #tpu.memory_space<vmem>>, vector<1x1x16x16xf32>,
    return
  }
  func.func @transform_0(%arg0: i32, %arg1: i32, %arg2: i32) -> (i32, i32, i32, i32) {
    %c0_i32 = arith.constant 0 : i32
    %c0_i32_0 = arith.constant 0 : i32
    %c0_i32_1 = arith.constant 0 : i32
    return %arg0, %arg1, %c0_i32, %c0_i32_0 : i32, i32, i32, i32
  }
  func.func @transform_1(%arg0: i32, %arg1: i32, %arg2: i32) -> (i32, i32) {
    %c0_i32 = arith.constant 0 : i32
    %c0_i32_0 = arith.constant 0 : i32
    %c0_i32_1 = arith.constant 0 : i32
    return %c0_i32, %c0_i32_0 : i32, i32
  }
  func.func @transform_2(%arg0: i32, %arg1: i32, %arg2: i32) -> (i32, i32) {
    %c0_i32 = arith.constant 0 : i32
    %c0_i32_0 = arith.constant 0 : i32
    return %arg2, %c0_i32 : i32, i32
  }
  func.func @transform_3(%arg0: i32, %arg1: i32, %arg2: i32) -> (i32, i32, i32, i32) {
    %c0_i32 = arith.constant 0 : i32
    %c0_i32_0 = arith.constant 0 : i32
    return %arg0, %arg1, %arg2, %c0_i32 : i32, i32, i32, i32
  }
}

</mosaic_0001>

<llo_original>
// kernel: simple_segmentation_forward.2
$region0: #{simple_segmentation_forward.2}
  #allocation0 [shape = 'u32[]', space=smem, size = 0x4, offset = 0x4, fixed_abs, tag = 'smem constant byte address 0x4 - core index']
  #allocation1 [shape = 'u32[72,128]{1,0:T(1,128)}', space=vmem, size = 0x9000, scoped, tag = 'internal scratch']
  %s0 = inlined_call_operand.vmem [shape: f32[2,4,16], index: 0, kind: input, shape index: {}]
  %s1 = inlined_call_operand.vmem [shape: f32[2,4,16], index: 1, kind: input, shape index: {}]
  %s2 = inlined_call_operand.vmem [shape: f32[6,4], index: 2, kind: input, shape index: {}]
  %s3 = inlined_call_operand.vmem [shape: f32[6,4], index: 3, kind: input, shape index: {}]
  %s4 = inlined_call_operand.vmem [shape: f32[2,6,16], index: 4, kind: output, shape index: {}]
  %s5 = sld [smem:[#allocation0]]
  $region49: #{simple_segmentation_forward.2} parent=0
    _
  %s7 = ssub.s32 1, %s5
  %s8 = scalar_select 0, %s7, %s5
  loop: start=0, step=1, limit=4
  $region2: #{simple_segmentation_forward.2} parent=0 // loop_pre_header
    _
  $region3: #{simple_segmentation_forward.2} parent=0 // loop_header
    %s10 = sphi 0, %s14
    %p11 = scmp.ge.s32.totalorder %s10, 4
    %s17 = sphi 0, %s29
    %s18 = sphi 0, %s25
    %s19 = sphi 0, %s17
    %s20 = sphi 0, %s18
    %s21 = sphi 0, %s19
    %s22 = sphi 0, %s20
    %s34 = sphi 0, %s36
    %s37 = sphi 0, %s34
    %s38 = sphi 0, %s37
    %s54 = sphi 0, %s38
    %s62 = sphi 0, %s64
    %s65 = sphi 0, %s62
    %s66 = sphi 0, %s65
    %s82 = sphi 0, %s66
    %s86 = sphi 0, %s86
    %s88 = sphi 0, %s86
    %s89 = sphi 0, %s88
    %s103 = sphi 0, %s89
    %s107 = sphi 0, %s107
    %s109 = sphi 0, %s107
    %s110 = sphi 0, %s109
    %s124 = sphi 0, %s110
    %s132 = sphi 0, %s134
    %s135 = sphi 0, %s132
    %s136 = sphi 0, %s135
    %s152 = sphi 0, %s136
  $region4: #{simple_segmentation_forward.2} parent=0 // loop_header_branch
    %13 = sbr.rel (%p11) target = $region8
  $region5: #{simple_segmentation_forward.2} parent=0 // loop_body
    %s15 = ssub.s32 %s10, 1
    %s16 = ssub.s32 %s10, 2
    %s23 = sadd.s32 1, %s18
    %p24 = scmp.ge.s32.totalorder %s23, 1
    %s25 = scalar_select %p24, 0, %s23
    %s26 = sadd.s32 1, %s17
    %s27 = scalar_select %p24, %s26, %s17
    %p28 = scmp.ge.s32.totalorder %s27, 2
    %s29 = scalar_select %p28, 0, %s27
    %s30 = ssub.s32 %s17, %s29
    %s31 = ssub.s32 %s18, %s25
    %s32 = sor.u32 %s30, %s31
    %p33 = scmp.eq.s32.totalorder %s32, 0
    %s35 = sadd.s32 %s34, 1
    %s36 = scalar_select %p33, %s34, %s35
    %p39 = pneg %p33
    %p40 = scmp.eq.s32.totalorder %s10, 1
    %p41 = por %p39, %p40
    %p42 = scmp.ne.s32.totalorder %s34, %s37
    %p43 = scmp.eq.s32.totalorder %s10, 0
    %p44 = por %p42, %p43
    %p45 = scmp.ne.s32.totalorder %s34, %s37
    %p46 = scmp.eq.s32.totalorder %s15, 1
    %p47 = por %p45, %p46
    %p48 = scmp.ne.s32.totalorder %s37, %s38
    %p49 = scmp.eq.s32.totalorder %s15, 0
    %p50 = por %p48, %p49
    %p51 = scmp.ne.s32.totalorder %s37, %s38
    %p52 = scmp.eq.s32.totalorder %s16, 1
    %p53 = por %p51, %p52
    %p55 = scmp.ne.s32.totalorder %s38, %s54
    %p56 = scmp.eq.s32.totalorder %s16, 0
    %p57 = por %p55, %p56
    %s58 = ssub.s32 %s17, %s29
    %s59 = ssub.s32 %s18, %s25
    %s60 = sor.u32 %s58, %s59
    %p61 = scmp.eq.s32.totalorder %s60, 0
    %s63 = sadd.s32 %s62, 1
    %s64 = scalar_select %p61, %s62, %s63
    %p67 = pneg %p61
    %p68 = scmp.eq.s32.totalorder %s10, 1
    %p69 = por %p67, %p68
    %p70 = scmp.ne.s32.totalorder %s62, %s65
    %p71 = scmp.eq.s32.totalorder %s10, 0
    %p72 = por %p70, %p71
    %p73 = scmp.ne.s32.totalorder %s62, %s65
    %p74 = scmp.eq.s32.totalorder %s15, 1
    %p75 = por %p73, %p74
    %p76 = scmp.ne.s32.totalorder %s65, %s66
    %p77 = scmp.eq.s32.totalorder %s15, 0
    %p78 = por %p76, %p77
    %p79 = scmp.ne.s32.totalorder %s65, %s66
    %p80 = scmp.eq.s32.totalorder %s16, 1
    %p81 = por %p79, %p80
    %p83 = scmp.ne.s32.totalorder %s66, %s82
    %p84 = scmp.eq.s32.totalorder %s16, 0
    %p85 = por %p83, %p84
    %s87 = sadd.s32 %s86, 1
    %p90 = scmp.eq.s32.totalorder %s10, 1
    %p91 = scmp.ne.s32.totalorder %s86, %s88
    %p92 = scmp.eq.s32.totalorder %s10, 0
    %p93 = por %p91, %p92
    %p94 = scmp.ne.s32.totalorder %s86, %s88
    %p95 = scmp.eq.s32.totalorder %s15, 1
    %p96 = por %p94, %p95
    %p97 = scmp.ne.s32.totalorder %s88, %s89
    %p98 = scmp.eq.s32.totalorder %s15, 0
    %p99 = por %p97, %p98
    %p100 = scmp.ne.s32.totalorder %s88, %s89
    %p101 = scmp.eq.s32.totalorder %s16, 1
    %p102 = por %p100, %p101
    %p104 = scmp.ne.s32.totalorder %s89, %s103
    %p105 = scmp.eq.s32.totalorder %s16, 0
    %p106 = por %p104, %p105
    %s108 = sadd.s32 %s107, 1
    %p111 = scmp.eq.s32.totalorder %s10, 1
    %p112 = scmp.ne.s32.totalorder %s107, %s109
    %p113 = scmp.eq.s32.totalorder %s10, 0
    %p114 = por %p112, %p113
    %p115 = scmp.ne.s32.totalorder %s107, %s109
    %p116 = scmp.eq.s32.totalorder %s15, 1
    %p117 = por %p115, %p116
    %p118 = scmp.ne.s32.totalorder %s109, %s110
    %p119 = scmp.eq.s32.totalorder %s15, 0
    %p120 = por %p118, %p119
    %p121 = scmp.ne.s32.totalorder %s109, %s110
    %p122 = scmp.eq.s32.totalorder %s16, 1
    %p123 = por %p121, %p122
    %p125 = scmp.ne.s32.totalorder %s110, %s124
    %p126 = scmp.eq.s32.totalorder %s16, 0
    %p127 = por %p125, %p126
    %s128 = ssub.s32 %s17, %s29
    %s129 = ssub.s32 %s18, %s25
    %s130 = sor.u32 %s128, %s129
    %p131 = scmp.eq.s32.totalorder %s130, 0
    %s133 = sadd.s32 %s132, 1
    %s134 = scalar_select %p131, %s132, %s133
    %p137 = pneg %p131
    %p138 = scmp.eq.s32.totalorder %s10, 1
    %p139 = por %p137, %p138
    %p140 = scmp.ne.s32.totalorder %s132, %s135
    %p141 = scmp.eq.s32.totalorder %s10, 0
    %p142 = por %p140, %p141
    %p143 = scmp.ne.s32.totalorder %s132, %s135
    %p144 = scmp.eq.s32.totalorder %s15, 1
    %p145 = por %p143, %p144
    %p146 = scmp.ne.s32.totalorder %s135, %s136
    %p147 = scmp.eq.s32.totalorder %s15, 0
    %p148 = por %p146, %p147
    %p149 = scmp.ne.s32.totalorder %s135, %s136
    %p150 = scmp.eq.s32.totalorder %s16, 1
    %p151 = por %p149, %p150
    %p153 = scmp.ne.s32.totalorder %s136, %s152
    %p154 = scmp.eq.s32.totalorder %s16, 0
    %p155 = por %p153, %p154
    %p156 = scmp.le.s32.totalorder 1, %s10
    %p157 = scmp.lt.s32.totalorder %s10, 3
    %p158 = pnand %p156, %p157
    %p159 = pneg %p158
    // Predicated region
    $region9: #{simple_segmentation_forward.2} parent=5 // pred_check
      _
    $region10: #{simple_segmentation_forward.2} parent=5 // pred_check_branch
      %161 = sbr.rel (%p158) target = $region12
    $region11: #{simple_segmentation_forward.2} parent=5 // pred_region
      %s162 = ssub.s32 %s10, 1
      // Predicated region
      $region13: #{simple_segmentation_forward.2} parent=11 // pred_check
        %p163 = pneg %p99
      $region14: #{simple_segmentation_forward.2} parent=11 // pred_check_branch
        %165 = sbr.rel (%p163) target = $region16
      $region15: #{simple_segmentation_forward.2} parent=11 // pred_region
        _
      $region16: #{simple_segmentation_forward.2} parent=11 // pred_fallthru
        _
      // Predicated region
      $region17: #{simple_segmentation_forward.2} parent=11 // pred_check
        %p166 = pneg %p120
      $region18: #{simple_segmentation_forward.2} parent=11 // pred_check_branch
        %168 = sbr.rel (%p166) target = $region20
      $region19: #{simple_segmentation_forward.2} parent=11 // pred_region
        _
      $region20: #{simple_segmentation_forward.2} parent=11 // pred_fallthru
        _
    $region12: #{simple_segmentation_forward.2} parent=5 // pred_fallthru
      _
    %p169 = scmp.lt.s32.totalorder %s10, 2
    // Predicated region
    $region21: #{simple_segmentation_forward.2} parent=5 // pred_check
      %p170 = pneg %p169
    $region22: #{simple_segmentation_forward.2} parent=5 // pred_check_branch
      %172 = sbr.rel (%p170) target = $region24
    $region23: #{simple_segmentation_forward.2} parent=5 // pred_region
      // Predicated region
      $region25: #{simple_segmentation_forward.2} parent=23 // pred_check
        %p173 = pneg %p44
      $region26: #{simple_segmentation_forward.2} parent=23 // pred_check_branch
        %175 = sbr.rel (%p173) target = $region28
      $region27: #{simple_segmentation_forward.2} parent=23 // pred_region
        %p176 = scmp.lt.s32.totalorder %s17, 1
        %s177 = scalar_select %p176, %s17, 1
        %p178 = scmp.lt.s32.totalorder %s18, 0
        %s179 = scalar_select %p178, %s18, 0
        %s180 = sadd.s32 %s179, %s177
        %s181 = smul.addr %s180, 4
        %s182 = scalar_lea.vmem %s0, %s181
      $region28: #{simple_segmentation_forward.2} parent=23 // pred_fallthru
        _
      // Predicated region
      $region29: #{simple_segmentation_forward.2} parent=23 // pred_check
        %p183 = pneg %p72
      $region30: #{simple_segmentation_forward.2} parent=23 // pred_check_branch
        %185 = sbr.rel (%p183) target = $region32
      $region31: #{simple_segmentation_forward.2} parent=23 // pred_region
        %p186 = scmp.lt.s32.totalorder %s17, 1
        %s187 = scalar_select %p186, %s17, 1
        %p188 = scmp.lt.s32.totalorder %s18, 0
        %s189 = scalar_select %p188, %s18, 0
        %s190 = sadd.s32 %s189, %s187
        %s191 = smul.addr %s190, 4
        %s192 = scalar_lea.vmem %s1, %s191
      $region32: #{simple_segmentation_forward.2} parent=23 // pred_fallthru
        _
    $region24: #{simple_segmentation_forward.2} parent=5 // pred_fallthru
      _
    %p193 = scmp.le.s32.totalorder 1, %s10
    %p194 = scmp.lt.s32.totalorder %s10, 3
    %p195 = pnand %p193, %p194
    %p196 = pneg %p195
    // Predicated region
    $region33: #{simple_segmentation_forward.2} parent=5 // pred_check
      _
    $region34: #{simple_segmentation_forward.2} parent=5 // pred_check_branch
      %198 = sbr.rel (%p195) target = $region36
    $region35: #{simple_segmentation_forward.2} parent=5 // pred_region
      %s199 = ssub.s32 %s10, 1
      %p200 = scmp.lt.s32.totalorder %s19, 1
      %s201 = scalar_select %p200, %s19, 1
      %p202 = scmp.lt.s32.totalorder %s20, 0
      %s203 = scalar_select %p202, %s20, 0
      %s204 = sadd.s32 %s203, %s201
      %s205 = smul.addr %s204, 4
      %s206 = scalar_lea.vmem %s0, %s205
      %p207 = pneg %p50
      %p208 = pneg %p47
      %p209 = scmp.lt.s32.totalorder %s19, 1
      %s210 = scalar_select %p209, %s19, 1
      %p211 = scmp.lt.s32.totalorder %s20, 0
      %s212 = scalar_select %p211, %s20, 0
      %s213 = sadd.s32 %s212, %s210
      %s214 = smul.addr %s213, 4
      %s215 = scalar_lea.vmem %s1, %s214
      %p216 = pneg %p78
      %p217 = pneg %p75
      %p218 = pneg %p99
      %p219 = pneg %p96
      %p220 = pneg %p120
      %p221 = pneg %p117
      %p222 = pneg %p148
      %p223 = pneg %p145
      %p224 = scmp.lt.s32.totalorder %s19, 1
      %s225 = scalar_select %p224, %s19, 1
      %p226 = scmp.lt.s32.totalorder %s20, 0
      %s227 = scalar_select %p226, %s20, 0
      %s228 = sadd.s32 %s227, %s225
      %s229 = smul.addr %s228, 8
      %s230 = scalar_lea.vmem %s4, %s229
      %p231 = scmp.lt.s32.totalorder %s19, 1
      %s232 = scalar_select %p231, %s19, 1
      %p233 = scmp.lt.s32.totalorder %s20, 0
      %s234 = scalar_select %p233, %s20, 0
      %s235 = sadd.s32 %s234, %s232
      %s236 = smul.addr %s235, 4
      %s237 = scalar_lea.vmem %s0, %s236
      %p238 = scmp.lt.s32.totalorder %s19, 1
      %s239 = scalar_select %p238, %s19, 1
      %p240 = scmp.lt.s32.totalorder %s20, 0
      %s241 = scalar_select %p240, %s20, 0
      %s242 = sadd.s32 %s241, %s239
      %s243 = smul.addr %s242, 4
      %s244 = scalar_lea.vmem %s1, %s243
      %p245 = scmp.lt.s32.totalorder %s19, 1
      %s246 = scalar_select %p245, %s19, 1
      %p247 = scmp.lt.s32.totalorder %s20, 0
      %s248 = scalar_select %p247, %s20, 0
      %s249 = sadd.s32 %s248, %s246
      %s250 = smul.addr %s249, 8
      %s251 = scalar_lea.vmem %s4, %s250
      %v252 = vld [vmem:[%s2] sm:$0x3f]
      %v253 = vld [vmem:[%s237] sm:$0xf]
      %v254 = vld [vmem:[%s3] sm:$0x3f]
      %v255 = vld [vmem:[%s244] sm:$0xf]
      %vm256 = vcmask 31744
      %v258 = vsel %vm256, %v254, 0
      %vm260 = vcmask 1043456
      %v262 = vsel %vm260, %v255, 0
      %264 = vmatpush.msra.mxu0 0.0
      %265 = vmatpush.msra.mxu0 0.0
      %266 = vmatpush.msra.mxu0 0.0
      %267 = vmatpush.msra.mxu0 0.0
      %268 = vmatpush.msra.mxu0 0.0
      %269 = vmatpush.msra.mxu0 0.0
      %270 = vmatpush.msra.mxu0 0.0
      %271 = vmatpush.msra.mxu0 0.0
      %272 = vmatpush.msra.mxu0 0.0
      %273 = vmatpush.msra.mxu0 0.0
      %274 = vmatpush.msra.mxu0 0.0
      %275 = vmatpush.msra.mxu0 0.0
      %276 = vmatpush.msra.mxu0 0.0
      %277 = vmatpush.msra.mxu0 0.0
      %278 = vmatpush.msra.mxu0 0.0
      %279 = vmatpush.msra.mxu0 %v262
      %280 = vmatmul.f32.gmra.mxu0 %v258
      %v281 = vpop.f32.mrf.mxu0
      %v282 = vadd.f32 0.0, %v281
      %283 = vdwg.mxu0
      %v285 = vsel %vm256, %v252, 0
      %v288 = vsel %vm260, %v253, 0
      %290 = vmatpush.msra.mxu0 0.0
      %291 = vmatpush.msra.mxu0 0.0
      %292 = vmatpush.msra.mxu0 0.0
      %293 = vmatpush.msra.mxu0 0.0
      %294 = vmatpush.msra.mxu0 0.0
      %295 = vmatpush.msra.mxu0 0.0
      %296 = vmatpush.msra.mxu0 0.0
      %297 = vmatpush.msra.mxu0 0.0
      %298 = vmatpush.msra.mxu0 0.0
      %299 = vmatpush.msra.mxu0 0.0
      %300 = vmatpush.msra.mxu0 0.0
      %301 = vmatpush.msra.mxu0 0.0
      %302 = vmatpush.msra.mxu0 0.0
      %303 = vmatpush.msra.mxu0 0.0
      %304 = vmatpush.msra.mxu0 0.0
      %305 = vmatpush.msra.mxu0 %v288
      %306 = vmatmul.f32.gmra.mxu0 %v285
      %v307 = vpop.f32.mrf.mxu0
      %v308 = vadd.f32 %v282, %v307
      %309 = vdwg.mxu0
      %vm310 = vcmask 128000
      %311 = vst.msk [vmem:[%s251] sm:$0x3f] %vm310, %v308
      %p312 = scmp.lt.s32.totalorder %s19, 1
      %s313 = scalar_select %p312, %s19, 1
      %p314 = scmp.lt.s32.totalorder %s20, 0
      %s315 = scalar_select %p314, %s20, 0
      %s316 = sadd.s32 %s315, %s313
      %s317 = smul.addr %s316, 8
      %s318 = scalar_lea.vmem %s4, %s317
      // Predicated region
      $region37: #{simple_segmentation_forward.2} parent=35 // pred_check
        %p319 = pneg %p145
      $region38: #{simple_segmentation_forward.2} parent=35 // pred_check_branch
        %321 = sbr.rel (%p319) target = $region40
      $region39: #{simple_segmentation_forward.2} parent=35 // pred_region
        _
      $region40: #{simple_segmentation_forward.2} parent=35 // pred_fallthru
        _
    $region36: #{simple_segmentation_forward.2} parent=5 // pred_fallthru
      _
    %p322 = scmp.le.s32.totalorder 2, %s10
    // Predicated region
    $region41: #{simple_segmentation_forward.2} parent=5 // pred_check
      %p323 = pneg %p322
    $region42: #{simple_segmentation_forward.2} parent=5 // pred_check_branch
      %325 = sbr.rel (%p323) target = $region44
    $region43: #{simple_segmentation_forward.2} parent=5 // pred_region
      %s326 = ssub.s32 %s10, 2
      // Predicated region
      $region45: #{simple_segmentation_forward.2} parent=43 // pred_check
        %p327 = pneg %p151
      $region46: #{simple_segmentation_forward.2} parent=43 // pred_check_branch
        %329 = sbr.rel (%p327) target = $region48
      $region47: #{simple_segmentation_forward.2} parent=43 // pred_region
        %p330 = scmp.lt.s32.totalorder %s21, 1
        %s331 = scalar_select %p330, %s21, 1
        %p332 = scmp.lt.s32.totalorder %s22, 0
        %s333 = scalar_select %p332, %s22, 0
        %s334 = sadd.s32 %s333, %s331
        %s335 = smul.addr %s334, 8
        %s336 = scalar_lea.vmem %s4, %s335
      $region48: #{simple_segmentation_forward.2} parent=43 // pred_fallthru
        _
    $region44: #{simple_segmentation_forward.2} parent=5 // pred_fallthru
      _
  $region6: #{simple_segmentation_forward.2} parent=0 // loop_footer
    %s14 = sadd.s32 1, %s10
  $region7: #{simple_segmentation_forward.2} parent=0 // loop_footer_branch
    %9 = sbr.rel target = $region3
  $region8: #{simple_segmentation_forward.2} parent=0 // loop_exit
    _

// kernel: simple_segmentation_forward.3
$region0: #{simple_segmentation_forward.3}
  #allocation0 [shape = 'u32[]', space=smem, size = 0x4, offset = 0x4, fixed_abs, tag = 'smem constant byte address 0x4 - core index']
  #allocation1 [shape = 'u32[72,128]{1,0:T(1,128)}', space=vmem, size = 0x9000, scoped, tag = 'internal scratch']
  #allocation2 [shape = 'f32[4,16]{1,0:T(4,128)}', space=vmem, size = 0x800, scoped, tag = 'scratch operand']
  %s0 = inlined_call_operand.vmem [shape: f32[2,6,4,4], index: 0, kind: input, shape index: {}]
  %s1 = inlined_call_operand.vmem [shape: f32[4,16], index: 1, kind: input, shape index: {}]
  %s2 = inlined_call_operand.vmem [shape: f32[16,4], index: 2, kind: input, shape index: {}]
  %s3 = inlined_call_operand.hbm [shape: f32[2,6,16,16], index: 3, kind: output, shape index: {}]
  %s4 = sld [smem:[#allocation0]]
  $region49: #{simple_segmentation_forward.3} parent=0
    _
  %s6 = ssub.s32 1, %s4
  %s7 = scalar_select 0, %s6, %s4
  $region1: #{simple_segmentation_forward.3} parent=0
    #allocation3 [shape = 'u8[16384]{0}', space=vmem, size = 0x4000, scoped, tag = 'output window, operand 0']
    #allocation4 [shape = 's32[2]{0}', space=sflag, size = 0x8, scoped, tag = 'scoped memory for simple_segmentation_forward.3']
    %8 = vsyncpa [#allocation4], 0
    %s9 = scalar_lea.sflag [#allocation4], 1
    %10 = vsyncpa %s9, 0
    loop: start=0, step=1, limit=14
    $region2: #{simple_segmentation_forward.3} parent=1 // loop_pre_header
      _
    $region3: #{simple_segmentation_forward.3} parent=1 // loop_header
      %s12 = sphi 0, %s16
      %p13 = scmp.ge.s32.totalorder %s12, 14
      %s19 = sphi 0, %s38
      %s20 = sphi 0, %s34
      %s21 = sphi 0, %s30
      %s22 = sphi 0, %s19
      %s23 = sphi 0, %s20
      %s24 = sphi 0, %s21
      %s25 = sphi 0, %s22
      %s26 = sphi 0, %s23
      %s27 = sphi 0, %s24
      %s43 = sphi 0, %s45
      %s46 = sphi 0, %s43
      %s47 = sphi 0, %s46
      %s63 = sphi 0, %s47
      %s67 = sphi 0, %s67
      %s69 = sphi 0, %s67
      %s70 = sphi 0, %s69
      %s84 = sphi 0, %s70
      %s90 = sphi 0, %s92
      %s93 = sphi 0, %s90
      %s94 = sphi 0, %s93
      %s110 = sphi 0, %s94
      %s120 = sphi 0, %s122
      %s123 = sphi 0, %s120
      %s124 = sphi 0, %s123
      %s140 = sphi 0, %s124
    $region4: #{simple_segmentation_forward.3} parent=1 // loop_header_branch
      %15 = sbr.rel (%p13) target = $region8
    $region5: #{simple_segmentation_forward.3} parent=1 // loop_body
      %s17 = ssub.s32 %s12, 1
      %s18 = ssub.s32 %s12, 2
      %s28 = sadd.s32 1, %s21
      %p29 = scmp.ge.s32.totalorder %s28, 1
      %s30 = scalar_select %p29, 0, %s28
      %s31 = sadd.s32 1, %s20
      %s32 = scalar_select %p29, %s31, %s20
      %p33 = scmp.ge.s32.totalorder %s32, 6
      %s34 = scalar_select %p33, 0, %s32
      %s35 = sadd.s32 1, %s19
      %s36 = scalar_select %p33, %s35, %s19
      %p37 = scmp.ge.s32.totalorder %s36, 2
      %s38 = scalar_select %p37, 0, %s36
      %s39 = ssub.s32 %s19, %s38
      %s40 = ssub.s32 %s20, %s34
      %s41 = sor.u32 %s39, %s40
      %p42 = scmp.eq.s32.totalorder %s41, 0
      %s44 = sadd.s32 %s43, 1
      %s45 = scalar_select %p42, %s43, %s44
      %p48 = pneg %p42
      %p49 = scmp.eq.s32.totalorder %s12, 11
      %p50 = por %p48, %p49
      %p51 = scmp.ne.s32.totalorder %s43, %s46
      %p52 = scmp.eq.s32.totalorder %s12, 0
      %p53 = por %p51, %p52
      %p54 = scmp.ne.s32.totalorder %s43, %s46
      %p55 = scmp.eq.s32.totalorder %s17, 11
      %p56 = por %p54, %p55
      %p57 = scmp.ne.s32.totalorder %s46, %s47
      %p58 = scmp.eq.s32.totalorder %s17, 0
      %p59 = por %p57, %p58
      %p60 = scmp.ne.s32.totalorder %s46, %s47
      %p61 = scmp.eq.s32.totalorder %s18, 11
      %p62 = por %p60, %p61
      %p64 = scmp.ne.s32.totalorder %s47, %s63
      %p65 = scmp.eq.s32.totalorder %s18, 0
      %p66 = por %p64, %p65
      %s68 = sadd.s32 %s67, 1
      %p71 = scmp.eq.s32.totalorder %s12, 11
      %p72 = scmp.ne.s32.totalorder %s67, %s69
      %p73 = scmp.eq.s32.totalorder %s12, 0
      %p74 = por %p72, %p73
      %p75 = scmp.ne.s32.totalorder %s67, %s69
      %p76 = scmp.eq.s32.totalorder %s17, 11
      %p77 = por %p75, %p76
      %p78 = scmp.ne.s32.totalorder %s69, %s70
      %p79 = scmp.eq.s32.totalorder %s17, 0
      %p80 = por %p78, %p79
      %p81 = scmp.ne.s32.totalorder %s69, %s70
      %p82 = scmp.eq.s32.totalorder %s18, 11
      %p83 = por %p81, %p82
      %p85 = scmp.ne.s32.totalorder %s70, %s84
      %p86 = scmp.eq.s32.totalorder %s18, 0
      %p87 = por %p85, %p86
      %s88 = ssub.s32 %s21, %s30
      %p89 = scmp.eq.s32.totalorder %s88, 0
      %s91 = sadd.s32 %s90, 1
      %s92 = scalar_select %p89, %s90, %s91
      %p95 = pneg %p89
      %p96 = scmp.eq.s32.totalorder %s12, 11
      %p97 = por %p95, %p96
      %p98 = scmp.ne.s32.totalorder %s90, %s93
      %p99 = scmp.eq.s32.totalorder %s12, 0
      %p100 = por %p98, %p99
      %p101 = scmp.ne.s32.totalorder %s90, %s93
      %p102 = scmp.eq.s32.totalorder %s17, 11
      %p103 = por %p101, %p102
      %p104 = scmp.ne.s32.totalorder %s93, %s94
      %p105 = scmp.eq.s32.totalorder %s17, 0
      %p106 = por %p104, %p105
      %p107 = scmp.ne.s32.totalorder %s93, %s94
      %p108 = scmp.eq.s32.totalorder %s18, 11
      %p109 = por %p107, %p108
      %p111 = scmp.ne.s32.totalorder %s94, %s110
      %p112 = scmp.eq.s32.totalorder %s18, 0
      %p113 = por %p111, %p112
      %s114 = ssub.s32 %s19, %s38
      %s115 = ssub.s32 %s20, %s34
      %s116 = sor.u32 %s114, %s115
      %s117 = ssub.s32 %s21, %s30
      %s118 = sor.u32 %s116, %s117
      %p119 = scmp.eq.s32.totalorder %s118, 0
      %s121 = sadd.s32 %s120, 1
      %s122 = scalar_select %p119, %s120, %s121
      %p125 = pneg %p119
      %p126 = scmp.eq.s32.totalorder %s12, 11
      %p127 = por %p125, %p126
      %p128 = scmp.ne.s32.totalorder %s120, %s123
      %p129 = scmp.eq.s32.totalorder %s12, 0
      %p130 = por %p128, %p129
      %p131 = scmp.ne.s32.totalorder %s120, %s123
      %p132 = scmp.eq.s32.totalorder %s17, 11
      %p133 = por %p131, %p132
      %p134 = scmp.ne.s32.totalorder %s123, %s124
      %p135 = scmp.eq.s32.totalorder %s17, 0
      %p136 = por %p134, %p135
      %p137 = scmp.ne.s32.totalorder %s123, %s124
      %p138 = scmp.eq.s32.totalorder %s18, 11
      %p139 = por %p137, %p138
      %p141 = scmp.ne.s32.totalorder %s124, %s140
      %p142 = scmp.eq.s32.totalorder %s18, 0
      %p143 = por %p141, %p142
      %p144 = scmp.le.s32.totalorder 1, %s12
      %p145 = scmp.lt.s32.totalorder %s12, 13
      %p146 = pnand %p144, %p145
      %p147 = pneg %p146
      // Predicated region
      $region9: #{simple_segmentation_forward.3} parent=5 // pred_check
        _
      $region10: #{simple_segmentation_forward.3} parent=5 // pred_check_branch
        %149 = sbr.rel (%p146) target = $region12
      $region11: #{simple_segmentation_forward.3} parent=5 // pred_region
        %s150 = ssub.s32 %s12, 1
        // Predicated region
        $region13: #{simple_segmentation_forward.3} parent=11 // pred_check
          %p151 = pneg %p80
        $region14: #{simple_segmentation_forward.3} parent=11 // pred_check_branch
          %153 = sbr.rel (%p151) target = $region16
        $region15: #{simple_segmentation_forward.3} parent=11 // pred_region
          _
        $region16: #{simple_segmentation_forward.3} parent=11 // pred_fallthru
          _
        // Predicated region
        $region17: #{simple_segmentation_forward.3} parent=11 // pred_check
          %p154 = pneg %p106
        $region18: #{simple_segmentation_forward.3} parent=11 // pred_check_branch
          %156 = sbr.rel (%p154) target = $region20
        $region19: #{simple_segmentation_forward.3} parent=11 // pred_region
          %s157 = smul.u32 2, %s24
          %p158 = scmp.lt.s32.totalorder %s157, 1
          %s159 = scalar_select %p158, %s157, 1
          %s160 = smul.addr %s159, 8
          %s161 = scalar_lea.vmem %s2, %s160
          %s162 = smul.u32 2, %s24
        $region20: #{simple_segmentation_forward.3} parent=11 // pred_fallthru
          _
      $region12: #{simple_segmentation_forward.3} parent=5 // pred_fallthru
        _
      %p163 = scmp.lt.s32.totalorder %s12, 12
      // Predicated region
      $region21: #{simple_segmentation_forward.3} parent=5 // pred_check
        %p164 = pneg %p163
      $region22: #{simple_segmentation_forward.3} parent=5 // pred_check_branch
        %166 = sbr.rel (%p164) target = $region24
      $region23: #{simple_segmentation_forward.3} parent=5 // pred_region
        // Predicated region
        $region25: #{simple_segmentation_forward.3} parent=23 // pred_check
          %p167 = pneg %p53
        $region26: #{simple_segmentation_forward.3} parent=23 // pred_check_branch
          %169 = sbr.rel (%p167) target = $region28
        $region27: #{simple_segmentation_forward.3} parent=23 // pred_region
          %p170 = scmp.lt.s32.totalorder %s19, 1
          %s171 = scalar_select %p170, %s19, 1
          %p172 = scmp.lt.s32.totalorder %s20, 5
          %s173 = scalar_select %p172, %s20, 5
          %s174 = smul.addr %s171, 6
          %s175 = sadd.s32 %s173, %s174
          %s176 = smul.addr %s175, 4
          %s177 = scalar_lea.vmem %s0, %s176
        $region28: #{simple_segmentation_forward.3} parent=23 // pred_fallthru
          _
      $region24: #{simple_segmentation_forward.3} parent=5 // pred_fallthru
        _
      %p178 = scmp.le.s32.totalorder 1, %s12
      %p179 = scmp.lt.s32.totalorder %s12, 13
      %p180 = pnand %p178, %p179
      %p181 = pneg %p180
      // Predicated region
      $region29: #{simple_segmentation_forward.3} parent=5 // pred_check
        _
      $region30: #{simple_segmentation_forward.3} parent=5 // pred_check_branch
        %183 = sbr.rel (%p180) target = $region32
      $region31: #{simple_segmentation_forward.3} parent=5 // pred_region
        %s184 = ssub.s32 %s12, 1
        %p185 = scmp.lt.s32.totalorder %s22, 1
        %s186 = scalar_select %p185, %s22, 1
        %p187 = scmp.lt.s32.totalorder %s23, 5
        %s188 = scalar_select %p187, %s23, 5
        %s189 = smul.addr %s186, 6
        %s190 = sadd.s32 %s188, %s189
        %s191 = smul.addr %s190, 4
        %s192 = scalar_lea.vmem %s0, %s191
        %p193 = pneg %p59
        %p194 = pneg %p56
        %p195 = pneg %p80
        %p196 = pneg %p77
        %s197 = smul.u32 2, %s24
        %p198 = scmp.lt.s32.totalorder %s197, 1
        %s199 = scalar_select %p198, %s197, 1
        %s200 = smul.addr %s199, 8
        %s201 = scalar_lea.vmem %s2, %s200
        %p202 = pneg %p106
        %p203 = pneg %p103
        %p204 = pneg %p136
        %p205 = pneg %p133
        %s206 = sand.u32 %s123, 1
        %s207 = scalar_lea.sflag [#allocation4], %s206
        %s208 = sand.u32 %s123, 1
        %s209 = smul.addr %s208, 16
        %s210 = scalar_lea.vmem [#allocation3], %s209
        %p211 = scmp.lt.s32.totalorder %s22, 1
        %s212 = scalar_select %p211, %s22, 1
        %p213 = scmp.lt.s32.totalorder %s23, 5
        %s214 = scalar_select %p213, %s23, 5
        %s215 = smul.addr %s212, 6
        %s216 = sadd.s32 %s214, %s215
        %s217 = smul.addr %s216, 4
        %s218 = scalar_lea.vmem %s0, %s217
        %s219 = smul.u32 2, %s24
        %p220 = scmp.lt.s32.totalorder %s219, 1
        %s221 = scalar_select %p220, %s219, 1
        %s222 = smul.addr %s221, 8
        %s223 = scalar_lea.vmem %s2, %s222
        %s224 = smul.u32 2, %s24
        %s225 = smul.u32 2, %s24
        %p226 = scmp.eq.s32.totalorder %s24, 0
        // Predicated region
        $region33: #{simple_segmentation_forward.3} parent=31 // pred_check
          %p227 = pneg %p226
        $region34: #{simple_segmentation_forward.3} parent=31 // pred_check_branch
          %229 = sbr.rel (%p227) target = $region36
        $region35: #{simple_segmentation_forward.3} parent=31 // pred_region
          %v230 = vld [vmem:[%s218] sm:$0xf]
          %v231 = vld [vmem:[%s1] sm:$0xf]
          %vm232 = vcmask 31744
          %v234 = vsel %vm232, %v230, 0
          %vm236 = vcmask 1043456
          %v238 = vsel %vm236, %v231, 0
          %240 = vmatpush.msra.mxu0 0.0
          %241 = vmatpush.msra.mxu0 0.0
          %242 = vmatpush.msra.mxu0 0.0
          %243 = vmatpush.msra.mxu0 0.0
          %244 = vmatpush.msra.mxu0 0.0
          %245 = vmatpush.msra.mxu0 0.0
          %246 = vmatpush.msra.mxu0 0.0
          %247 = vmatpush.msra.mxu0 0.0
          %248 = vmatpush.msra.mxu0 0.0
          %249 = vmatpush.msra.mxu0 0.0
          %250 = vmatpush.msra.mxu0 0.0
          %251 = vmatpush.msra.mxu0 0.0
          %252 = vmatpush.msra.mxu0 0.0
          %253 = vmatpush.msra.mxu0 0.0
          %254 = vmatpush.msra.mxu0 0.0
          %255 = vmatpush.msra.mxu0 %v238
          %256 = vmatmul.f32.gmra.mxu0 %v234
          %v257 = vpop.f32.mrf.mxu0
          %v258 = vadd.f32 0.0, %v257
          %259 = vdwg.mxu0
          %vm260 = vcmask 125952
          %261 = vst.msk [vmem:[#allocation2] sm:$0xf] %vm260, %v258
        $region36: #{simple_segmentation_forward.3} parent=31 // pred_fallthru
          _
        %v262 = vld [vmem:[%s223] sm:$0xff]
        %v263 = vld [vmem:[%s223 + $0x8] sm:$0xff]
        %v264 = vld [vmem:[#allocation2] sm:$0xf]
        %vm265 = vcmask 31744
        %v267 = vsel %vm265, %v262, 0
        %v270 = vsel %vm265, %v263, 0
        %vm272 = vcmask 1043456
        %v274 = vsel %vm272, %v264, 0
        %276 = vmatpush.msra.mxu0 0.0
        %277 = vmatpush.msra.mxu0 0.0
        %278 = vmatpush.msra.mxu0 0.0
        %279 = vmatpush.msra.mxu0 0.0
        %280 = vmatpush.msra.mxu0 0.0
        %281 = vmatpush.msra.mxu0 0.0
        %282 = vmatpush.msra.mxu0 0.0
        %283 = vmatpush.msra.mxu0 0.0
        %284 = vmatpush.msra.mxu0 0.0
        %285 = vmatpush.msra.mxu0 0.0
        %286 = vmatpush.msra.mxu0 0.0
        %287 = vmatpush.msra.mxu0 0.0
        %288 = vmatpush.msra.mxu0 0.0
        %289 = vmatpush.msra.mxu0 0.0
        %290 = vmatpush.msra.mxu0 0.0
        %291 = vmatpush.msra.mxu0 %v274
        %292 = vmatmul.f32.gmra.mxu0 %v267
        %v293 = vpop.f32.mrf.mxu0
        %v294 = vadd.f32 0.0, %v293
        %295 = vmatmul.f32.gmra.mxu0 %v270
        %v296 = vpop.f32.mrf.mxu0
        %v297 = vadd.f32 0.0, %v296
        %298 = vdwg.mxu0
        %vm299 = vcmask 130048
        %300 = vst.msk [vmem:[%s210] sm:$0xff] %vm299, %v294
        %301 = vst.msk [vmem:[%s210 + $0x8] sm:$0xff] %vm299, %v297
        %s302 = sand.u32 %s123, 1
        %s303 = scalar_lea.sflag [#allocation4], %s302
        %s304 = sand.u32 %s123, 1
        %s305 = smul.addr %s304, 16
        %s306 = scalar_lea.vmem [#allocation3], %s305
        // Predicated region
        $region37: #{simple_segmentation_forward.3} parent=31 // pred_check
          %p307 = pneg %p133
        $region38: #{simple_segmentation_forward.3} parent=31 // pred_check_branch
          %309 = sbr.rel (%p307) target = $region40
        $region39: #{simple_segmentation_forward.3} parent=31 // pred_region
          %s310 = smul.u32 2, %s24
          %312 = vsyncadd %s303, 0
          %s313 = smul.addr %s23, 2
          %s314 = sadd.s32 %s310, %s313
          %s315 = smul.addr %s22, 12
          %s316 = sadd.s32 %s314, %s315
          %s317 = smul.addr %s316, 8
          %s318 = scalar_lea.hbm %s3, %s317
          %s319 = sshll.u32 %s306, 4
          %s320 = int_to_ptr.vmem [resolvable:$true] %s319
          %s321 = sshll.u32 %s318, 4
          %s322 = int_to_ptr.hbm [resolvable:$true] %s321
          %327 = dma.vmem_to_hbm [thread:$0]  %s320, 256, %s322, %s303, 128, 128, 8
        $region40: #{simple_segmentation_forward.3} parent=31 // pred_fallthru
          _
      $region32: #{simple_segmentation_forward.3} parent=5 // pred_fallthru
        _
      %p328 = scmp.le.s32.totalorder 2, %s12
      // Predicated region
      $region41: #{simple_segmentation_forward.3} parent=5 // pred_check
        %p329 = pneg %p328
      $region42: #{simple_segmentation_forward.3} parent=5 // pred_check_branch
        %331 = sbr.rel (%p329) target = $region44
      $region43: #{simple_segmentation_forward.3} parent=5 // pred_region
        %s332 = ssub.s32 %s12, 2
        // Predicated region
        $region45: #{simple_segmentation_forward.3} parent=43 // pred_check
          %p333 = pneg %p139
        $region46: #{simple_segmentation_forward.3} parent=43 // pred_check_branch
          %335 = sbr.rel (%p333) target = $region48
        $region47: #{simple_segmentation_forward.3} parent=43 // pred_region
          %s336 = sand.u32 %s124, 1
          %s337 = scalar_lea.sflag [#allocation4], %s336
          %s338 = sand.u32 %s124, 1
          %s339 = smul.addr %s338, 16
          %s340 = scalar_lea.vmem [#allocation3], %s339
          %342 = dma.done %s337, 256
        $region48: #{simple_segmentation_forward.3} parent=43 // pred_fallthru
          _
      $region44: #{simple_segmentation_forward.3} parent=5 // pred_fallthru
        _
    $region6: #{simple_segmentation_forward.3} parent=1 // loop_footer
      %s16 = sadd.s32 1, %s12
    $region7: #{simple_segmentation_forward.3} parent=1 // loop_footer_branch
      %11 = sbr.rel target = $region3
    $region8: #{simple_segmentation_forward.3} parent=1 // loop_exit
      _
    %343 = vsyncpa [#allocation4], 1
    %s344 = scalar_lea.sflag [#allocation4], 1
    %345 = vsyncpa %s344, 1

</llo_original>
